<compile_context>
chip_gen: v5e
topology: v5e:2x2
jax: 0.10.0
libtpu: 0.0.40
codegen_flags: <defaults>
</compile_context>

<pallas_src>
import functools

import jax
import jax.numpy as jnp
from jax.experimental import pallas as pl
from jax.experimental.pallas import tpu as pltpu


_RESIDENT_WEIGHT_BYTES = 16 * 1024 * 1024   # budget for both weight matrices


def _noisy_linear_kernel(x_ref, mu_ref, sig_ref, fin_ref, fout_ref, b_ref,
                         o_ref, acc_ref, *, tk, tn, resident):
    k = pl.program_id(2)

    @pl.when(k == 0)
    def _init():
        acc_ref[...] = jnp.zeros_like(acc_ref)

    if resident:
        # Full (Kp, Np) weight blocks live in VMEM for the whole call (constant
        # index_map -> DMA'd once); slice the current (tk, tn) tile with
        # tile-aligned dynamic offsets.
        koff = pl.multiple_of(k * tk, tk)
        joff = pl.multiple_of(pl.program_id(1) * tn, tn)
        mu = mu_ref[pl.ds(koff, tk), pl.ds(joff, tn)]
        sig = sig_ref[pl.ds(koff, tk), pl.ds(joff, tn)]
    else:
        mu = mu_ref[...]
        sig = sig_ref[...]

    # Build the noisy weight tile in VMEM. Elementwise math stays f32 (v5e has
    # no bf16 VPU); these FMAs are VPU filler under the MXU.
    f_in = fin_ref[...]                      # (tk, 1) f32, sublane-aligned
    f_out = fout_ref[...]                    # (1, tn) f32, lane-aligned
    w = (mu.astype(jnp.float32)
         + (f_in * f_out) * sig.astype(jnp.float32)).astype(mu.dtype)

    # Single canonical (M,K)x(K,N) contraction with f32 accumulation.
    acc_ref[...] += jnp.dot(x_ref[...], w, preferred_element_type=jnp.float32)

    @pl.when(k == pl.num_programs(2) - 1)
    def _epilogue():
        # noisy bias (bias_mu + bias_sigma * f_out) precomputed in the wrapper,
        # broadcast over the batch sublanes here.
        o_ref[...] = (acc_ref[...] + b_ref[...]).astype(o_ref.dtype)


def _round_up(v, m):
    return ((v + m - 1) // m) * m


def _pad2d(a, rows, cols):
    pr, pc = rows - a.shape[0], cols - a.shape[1]
    if pr or pc:
        a = jnp.pad(a, ((0, pr), (0, pc)))
    return a


def _pick_tile(extent, max_tile, align):
    """Pick an `align`-multiple tile <= max_tile with small padding waste."""
    extent = _round_up(extent, align)
    if extent <= max_tile:
        return extent
    best = None
    for c in range(align, max_tile + 1, align):
        padded = _round_up(extent, c)
        if (padded - extent) * 8 <= padded:          # <= 12.5% padding waste
            if best is None or c > best:
                best = c
    if best is not None:
        return best
    best_c, best_p = align, _round_up(extent, align)  # fall back: min padding
    for c in range(align, max_tile + 1, align):
        padded = _round_up(extent, c)
        if padded < best_p:
            best_c, best_p = c, padded
    return best_c


@functools.partial(jax.jit,
                   static_argnames=("tm", "tn", "tk", "compute_dtype",
                                    "weights_resident"))
def noisy_linear(x, mu, sigma, bias_mu, bias_sigma, eps_in, eps_out, *,
                 tm=256, tn=512, tk=1024, compute_dtype=jnp.bfloat16,
                 weights_resident=None):
    """y = x @ (mu + sigma*outer(f(eps_out), f(eps_in))).T + bias_mu + bias_sigma*f(eps_out)

    mu/sigma are (out_features, in_features) as in the PyTorch module.
    compute_dtype sets the MXU input dtype for x/mu/sigma (accumulation is
    always f32); pass compute_dtype=None to keep the input dtype exactly.
    """
    batch, in_features = x.shape
    out_features = mu.shape[0]
    out_dtype = x.dtype

    if compute_dtype is not None:
        x = x.astype(compute_dtype)
        mu = mu.astype(compute_dtype)
        sigma = sigma.astype(compute_dtype)
    cdtype = x.dtype
    isz = jnp.dtype(cdtype).itemsize
    osz = jnp.dtype(out_dtype).itemsize

    # f() transform and noisy bias: tiny 1-D ops, precompute in the wrapper.
    f_in = (jnp.sign(eps_in) * jnp.sqrt(jnp.abs(eps_in))).astype(jnp.float32)
    f_out = (jnp.sign(eps_out) * jnp.sqrt(jnp.abs(eps_out))).astype(jnp.float32)
    noisy_b = bias_mu.astype(jnp.float32) + bias_sigma.astype(jnp.float32) * f_out

    # K-major weights -> canonical (M,K)x(K,N) contraction.
    mu_t = mu.T          # (K, N)
    sigma_t = sigma.T    # (K, N)

    # Padded extents: 16-row sublane multiple for 16-bit compute dtypes
    # (8 for f32); 128-lane multiples for K and N (lane-dense output stores).
    row_align = 16 if isz < 4 else 8
    Mp0 = _round_up(batch, row_align)
    Kp0 = _round_up(in_features, 128)
    Np0 = _round_up(out_features, 128)

    tm = _pick_tile(Mp0, max(tm, row_align), row_align)
    tk = _pick_tile(Kp0, max(tk, 128), 128)
    tn = _pick_tile(Np0, max(tn, 128), 128)
    Mp = _round_up(Mp0, tm)
    Kp = _round_up(Kp0, tk)
    Np = _round_up(Np0, tn)

    # v7x megacore: keep >= 2 tiles along a "parallel" axis when possible so
    # the second TensorCore is not idle.
    if Mp // tm == 1 and Np // tn == 1 and Np >= 256:
        tn = Np // 2 if (Np // 2) % 128 == 0 else 128

    grid = (Mp // tm, Np // tn, Kp // tk)

    # Weights-resident mode: DMA mu/sigma once and reuse across every M/N tile
    # instead of re-streaming them (Mp/tm) times from HBM.
    w_bytes = 2 * Kp * Np * isz
    resident = (w_bytes <= _RESIDENT_WEIGHT_BYTES) if weights_resident is None \
        else bool(weights_resident)

    xp = _pad2d(x, Mp, Kp)
    mu_p = _pad2d(mu_t, Kp, Np)
    sig_p = _pad2d(sigma_t, Kp, Np)
    fin_p = _pad2d(f_in.reshape(-1, 1), Kp, 1)      # (Kp, 1) column
    fout_p = _pad2d(f_out.reshape(1, -1), 1, Np)    # (1, Np) row
    nb_p = _pad2d(noisy_b.reshape(1, -1), 1, Np)    # (1, Np) row

    if resident:
        mu_spec = pl.BlockSpec((Kp, Np), lambda i, j, k: (0, 0))
        sig_spec = pl.BlockSpec((Kp, Np), lambda i, j, k: (0, 0))
    else:
        mu_spec = pl.BlockSpec((tk, tn), lambda i, j, k: (k, j))
        sig_spec = pl.BlockSpec((tk, tn), lambda i, j, k: (k, j))

    # VMEM budget (double-buffered inputs + output + accumulator). Only raise
    # the scoped limit when resident weights push past the defaults
    # (16 MiB v5e / 32 MiB v6e,v7x); cap well under v7x's 64 MiB physical VMEM.
    vmem_est = (2 * tm * tk * isz
                + (2 * w_bytes if resident else 4 * tk * tn * isz)
                + 2 * tm * tn * osz
                + tm * tn * 4
                + 2 * 1024 * 1024)
    vmem_limit = None
    if vmem_est > 12 * 1024 * 1024:
        vmem_limit = min(max(vmem_est, 32 * 1024 * 1024), 48 * 1024 * 1024)

    gm = Mp // tm
    cost = pl.CostEstimate(
        flops=2 * Mp * Np * Kp + 3 * gm * Kp * Np + 2 * Mp * Np,
        transcendentals=0,
        bytes_accessed=(isz * Mp * Kp
                        + isz * 2 * Kp * Np * (1 if resident else gm)
                        + osz * Mp * Np
                        + 4 * (Kp + 2 * Np)),
    )

    kernel = functools.partial(_noisy_linear_kernel, tk=tk, tn=tn,
                               resident=resident)

    out = pl.pallas_call(
        kernel,
        out_shape=jax.ShapeDtypeStruct((Mp, Np), out_dtype),
        grid_spec=pltpu.PrefetchScalarGridSpec(
            num_scalar_prefetch=0,
            grid=grid,
            in_specs=[
                pl.BlockSpec((tm, tk), lambda i, j, k: (i, k)),   # x
                mu_spec,                                          # mu^T    (K, N)
                sig_spec,                                         # sigma^T (K, N)
                pl.BlockSpec((tk, 1), lambda i, j, k: (k, 0)),    # f(eps_in) col
                pl.BlockSpec((1, tn), lambda i, j, k: (0, j)),    # f(eps_out) row
                pl.BlockSpec((1, tn), lambda i, j, k: (0, j)),    # noisy bias row
            ],
            out_specs=pl.BlockSpec((tm, tn), lambda i, j, k: (i, j)),
            scratch_shapes=[pltpu.VMEM((tm, tn), jnp.float32)],
        ),
        compiler_params=pltpu.CompilerParams(
            dimension_semantics=("parallel", "parallel", "arbitrary"),
            vmem_limit_bytes=vmem_limit,
        ),
        cost_estimate=cost,
    )(xp, mu_p, sig_p, fin_p, fout_p, nb_p)

    return out[:batch, :out_features]


def init_noisy_linear_params(key, in_features, out_features, dtype=jnp.float32):
    """Deterministic reset_parameters() equivalent."""
    k_mu, k_bmu = jax.random.split(key)
    bound_w = 1.0 / (in_features ** 0.5)
    bound_b = 1.0 / (out_features ** 0.5)
    mu = jax.random.uniform(k_mu, (out_features, in_features), dtype,
                            minval=-bound_w, maxval=bound_w)
    sigma = jnp.full((out_features, in_features), 0.5 / (in_features ** 0.5), dtype)
    bias_mu = jax.random.uniform(k_bmu, (out_features,), dtype,
                                 minval=-bound_b, maxval=bound_b)
    bias_sigma = jnp.full((out_features,), 0.5 / (out_features ** 0.5), dtype)
    return mu, sigma, bias_mu, bias_sigma


def _reference(x, mu, sigma, bias_mu, bias_sigma, eps_in, eps_out):
    # Pure-JAX f32 reference (materialized noisy weight, as in PyTorch).
    f_in = jnp.sign(eps_in) * jnp.sqrt(jnp.abs(eps_in))
    f_out = jnp.sign(eps_out) * jnp.sqrt(jnp.abs(eps_out))
    noisy_w = mu + sigma * jnp.outer(f_out, f_in)
    noisy_b = bias_mu + bias_sigma * f_out
    return x @ noisy_w.T + noisy_b


if __name__ == "__main__":
    key = jax.random.PRNGKey(0)

    # --- Test 1: small aligned layer, f32 compute path (tight tolerance). ---
    batch, in_f, out_f = 8, 32, 64
    k_param, k_x, k_ein, k_eout, key = jax.random.split(key, 5)
    mu, sigma, bias_mu, bias_sigma = init_noisy_linear_params(k_param, in_f, out_f)
    x = jax.random.normal(k_x, (batch, in_f), jnp.float32)
    # use_noise=True path: fresh normal noise each forward (sampled with
    # jax.random here instead of the in-module buffer .normal_()).
    eps_in = jax.random.normal(k_ein, (in_f,), jnp.float32)
    eps_out = jax.random.normal(k_eout, (out_f,), jnp.float32)

    out = jax.block_until_ready(
        noisy_linear(x, mu, sigma, bias_mu, bias_sigma, eps_in, eps_out,
                     compute_dtype=None))
    ref = _reference(x, mu, sigma, bias_mu, bias_sigma, eps_in, eps_out)
    assert out.shape == ref.shape
    assert jnp.allclose(out, ref, atol=1e-4, rtol=1e-4), "f32 noisy mismatch"

    # use_noise=False path: zero noise -> plain linear (f(0) = 0).
    zin = jnp.zeros((in_f,), jnp.float32)
    zout = jnp.zeros((out_f,), jnp.float32)
    out_nn = jax.block_until_ready(
        noisy_linear(x, mu, sigma, bias_mu, bias_sigma, zin, zout,
                     compute_dtype=None))
    ref_nn = x @ mu.T + bias_mu
    assert jnp.allclose(out_nn, ref_nn, atol=1e-4, rtol=1e-4), \
        "use_noise=False mismatch"

    # --- Test 2: non-aligned layer, default bf16 compute; exercise both the
    # weights-resident and weight-streaming kernel variants (bf16 tolerance). ---
    batch, in_f, out_f = 20, 200, 300
    k_param, k_x, k_ein, k_eout, key = jax.random.split(key, 5)
    mu, sigma, bias_mu, bias_sigma = init_noisy_linear_params(k_param, in_f, out_f)
    x = jax.random.normal(k_x, (batch, in_f), jnp.float32)
    eps_in = jax.random.normal(k_ein, (in_f,), jnp.float32)
    eps_out = jax.random.normal(k_eout, (out_f,), jnp.float32)
    ref = _reference(x, mu, sigma, bias_mu, bias_sigma, eps_in, eps_out)

    out_res = jax.block_until_ready(
        noisy_linear(x, mu, sigma, bias_mu, bias_sigma, eps_in, eps_out,
                     weights_resident=True))
    out_str = jax.block_until_ready(
        noisy_linear(x, mu, sigma, bias_mu, bias_sigma, eps_in, eps_out,
                     weights_resident=False))
    assert jnp.allclose(out_res, ref, atol=5e-2, rtol=5e-2), \
        "bf16 resident-weights mismatch"
    assert jnp.allclose(out_str, ref, atol=5e-2, rtol=5e-2), \
        "bf16 streaming-weights mismatch"

    print("KERNEL_OK")
</pallas_src>

<mosaic_0001>
module attributes {stable_mosaic.version = 11 : i64} {
  func.func @_noisy_linear_kernel(%arg0: i32, %arg1: i32, %arg2: i32, %arg3: memref<8x128xf32, #tpu.memory_space<vmem>>, %arg4: memref<128x128xf32, #tpu.memory_space<vmem>>, %arg5: memref<128x128xf32, #tpu.memory_space<vmem>>, %arg6: memref<128x1xf32, #tpu.memory_space<vmem>>, %arg7: memref<1x128xf32, #tpu.memory_space<vmem>>, %arg8: memref<1x128xf32, #tpu.memory_space<vmem>>, %arg9: memref<8x128xf32, #tpu.memory_space<vmem>>, %arg10: memref<8x128xf32, #tpu.memory_space<vmem>>) attributes {dimension_semantics = [#tpu.dimension_semantics<parallel>, #tpu.dimension_semantics<parallel>, #tpu.dimension_semantics<arbitrary>], iteration_bounds = array<i64: 1, 1, 1>, scalar_prefetch = 0 : i64, scratch_operands = 1 : i64, tpu.core_type = #tpu.core_type<tc>, window_params = [{transform_indices = @transform_0, window_bounds = array<i64: 8, 128>}, {pipeline_mode = #tpu.pipeline_mode<synchronous>, transform_indices = @transform_1, window_bounds = array<i64: 128, 128>}, {pipeline_mode = #tpu.pipeline_mode<synchronous>, transform_indices = @transform_2, window_bounds = array<i64: 128, 128>}, {transform_indices = @transform_3, window_bounds = array<i64: 128, 1>}, {transform_indices = @transform_4, window_bounds = array<i64: 1, 128>}, {transform_indices = @transform_5, window_bounds = array<i64: 1, 128>}, {transform_indices = @transform_6, window_bounds = array<i64: 8, 128>}]} {
    %c0_i32 = arith.constant 0 : i32
    %0 = arith.cmpi eq, %arg2, %c0_i32 : i32
    %1 = arith.extui %0 : i1 to i32
    %c0_i32_0 = arith.constant 0 : i32
    %2 = arith.cmpi ne, %1, %c0_i32_0 : i32
    scf.if %2 {
      %cst_13 = arith.constant 0.000000e+00 : f32
      %28 = vector.broadcast %cst_13 : f32 to vector<8x128xf32>
      %c0_14 = arith.constant 0 : index
      %c0_15 = arith.constant 0 : index
      %29 = vector.load %arg10[%c0_14, %c0_15] : memref<8x128xf32, #tpu.memory_space<vmem>>, vector<8x128xf32>
      tpu.vector_store %arg10[%c0_14, %c0_15], %28 {strides = array<i32>} : memref<8x128xf32, #tpu.memory_space<vmem>>, vector<8x128xf32>,
    } else {
    }
    %c128_i32 = arith.constant 128 : i32
    %3 = arith.muli %arg2, %c128_i32 : i32
    %4 = tpu.assume_multiple %3, 128 : i32
    %c128_i32_1 = arith.constant 128 : i32
    %5 = arith.muli %arg1, %c128_i32_1 : i32
    %6 = tpu.assume_multiple %5, 128 : i32
    %7 = arith.index_cast %4 : i32 to index
    %8 = arith.index_cast %6 : i32 to index
    %9 = vector.load %arg4[%7, %8] : memref<128x128xf32, #tpu.memory_space<vmem>>, vector<128x128xf32>
    %10 = arith.index_cast %4 : i32 to index
    %11 = arith.index_cast %6 : i32 to index
    %12 = vector.load %arg5[%10, %11] : memref<128x128xf32, #tpu.memory_space<vmem>>, vector<128x128xf32>
    %c0 = arith.constant 0 : index
    %c0_2 = arith.constant 0 : index
    %13 = vector.load %arg6[%c0, %c0_2] : memref<128x1xf32, #tpu.memory_space<vmem>>, vector<128x1xf32>
    %c0_3 = arith.constant 0 : index
    %c0_4 = arith.constant 0 : index
    %14 = vector.load %arg7[%c0_3, %c0_4] : memref<1x128xf32, #tpu.memory_space<vmem>>, vector<1x128xf32>
    %15 = vector.broadcast %13 : vector<128x1xf32> to vector<128x128xf32>
    %16 = vector.broadcast %14 : vector<1x128xf32> to vector<128x128xf32>
    %17 = arith.mulf %15, %16 : vector<128x128xf32>
    %18 = arith.mulf %17, %12 : vector<128x128xf32>
    %19 = arith.addf %9, %18 : vector<128x128xf32>
    %c0_5 = arith.constant 0 : index
    %c0_6 = arith.constant 0 : index
    %20 = vector.load %arg10[%c0_5, %c0_6] : memref<8x128xf32, #tpu.memory_space<vmem>>, vector<8x128xf32>
    %c0_7 = arith.constant 0 : index
    %c0_8 = arith.constant 0 : index
    %21 = vector.load %arg3[%c0_7, %c0_8] : memref<8x128xf32, #tpu.memory_space<vmem>>, vector<8x128xf32>
    %cst = arith.constant dense<0.000000e+00> : vector<8x128xf32>
    %22 = tpu.matmul %21, %19, %cst {dimension_numbers = #tpu.dot_dimension_numbers<[1], [0], [0], [1], [0, 0, 1, 1], [], []>} : vector<8x128xf32>, vector<128x128xf32>, vector<8x128xf32> -> vector<8x128xf32>
    %23 = arith.addf %20, %22 : vector<8x128xf32>
    %c0_9 = arith.constant 0 : index
    %c0_10 = arith.constant 0 : index
    %24 = vector.load %arg10[%c0_9, %c0_10] : memref<8x128xf32, #tpu.memory_space<vmem>>, vector<8x128xf32>
    tpu.vector_store %arg10[%c0_9, %c0_10], %23 {strides = array<i32>} : memref<8x128xf32, #tpu.memory_space<vmem>>, vector<8x128xf32>,
    %c0_i32_11 = arith.constant 0 : i32
    %25 = arith.cmpi eq, %arg2, %c0_i32_11 : i32
    %26 = arith.extui %25 : i1 to i32
    %c0_i32_12 = arith.constant 0 : i32
    %27 = arith.cmpi ne, %26, %c0_i32_12 : i32
    scf.if %27 {
      %c0_13 = arith.constant 0 : index
      %c0_14 = arith.constant 0 : index
      %28 = vector.load %arg10[%c0_13, %c0_14] : memref<8x128xf32, #tpu.memory_space<vmem>>, vector<8x128xf32>
      %c0_15 = arith.constant 0 : index
      %c0_16 = arith.constant 0 : index
      %29 = vector.load %arg8[%c0_15, %c0_16] : memref<1x128xf32, #tpu.memory_space<vmem>>, vector<1x128xf32>
      %30 = vector.broadcast %29 : vector<1x128xf32> to vector<8x128xf32>
      %31 = arith.addf %28, %30 : vector<8x128xf32>
      %c0_17 = arith.constant 0 : index
      %c0_18 = arith.constant 0 : index
      %32 = vector.load %arg9[%c0_17, %c0_18] : memref<8x128xf32, #tpu.memory_space<vmem>>, vector<8x128xf32>
      tpu.vector_store %arg9[%c0_17, %c0_18], %31 {strides = array<i32>} : memref<8x128xf32, #tpu.memory_space<vmem>>, vector<8x128xf32>,
    } else {
    }
    return
  }
  func.func @transform_0(%arg0: i32, %arg1: i32, %arg2: i32) -> (i32, i32) {
    %c0_i32 = arith.constant 0 : i32
    return %arg0, %arg2 : i32, i32
  }
  func.func @transform_1(%arg0: i32, %arg1: i32, %arg2: i32) -> (i32, i32) {
    %c0_i32 = arith.constant 0 : i32
    %c0_i32_0 = arith.constant 0 : i32
    %c0_i32_1 = arith.constant 0 : i32
    return %c0_i32, %c0_i32_0 : i32, i32
  }
  func.func @transform_2(%arg0: i32, %arg1: i32, %arg2: i32) -> (i32, i32) {
    %c0_i32 = arith.constant 0 : i32
    %c0_i32_0 = arith.constant 0 : i32
    %c0_i32_1 = arith.constant 0 : i32
    return %c0_i32, %c0_i32_0 : i32, i32
  }
  func.func @transform_3(%arg0: i32, %arg1: i32, %arg2: i32) -> (i32, i32) {
    %c0_i32 = arith.constant 0 : i32
    %c0_i32_0 = arith.constant 0 : i32
    return %arg2, %c0_i32 : i32, i32
  }
  func.func @transform_4(%arg0: i32, %arg1: i32, %arg2: i32) -> (i32, i32) {
    %c0_i32 = arith.constant 0 : i32
    %c0_i32_0 = arith.constant 0 : i32
    return %c0_i32, %arg1 : i32, i32
  }
  func.func @transform_5(%arg0: i32, %arg1: i32, %arg2: i32) -> (i32, i32) {
    %c0_i32 = arith.constant 0 : i32
    %c0_i32_0 = arith.constant 0 : i32
    return %c0_i32, %arg1 : i32, i32
  }
  func.func @transform_6(%arg0: i32, %arg1: i32, %arg2: i32) -> (i32, i32) {
    %c0_i32 = arith.constant 0 : i32
    return %arg0, %arg1 : i32, i32
  }
}

</mosaic_0001>

<llo_original>
// kernel: noisy_linear.1
$region0: #{noisy_linear.1}
  #allocation0 [shape = 'u32[]', space=smem, size = 0x4, offset = 0x4, fixed_abs, tag = 'smem constant byte address 0x4 - core index']
  #allocation1 [shape = 'u32[72,128]{1,0:T(1,128)}', space=vmem, size = 0x9000, scoped, tag = 'internal scratch']
  #allocation2 [shape = 'f32[8,128]{1,0:T(8,128)}', space=vmem, size = 0x1000, scoped, tag = 'scratch operand']
  %s0 = inlined_call_operand.vmem [shape: f32[8,128], index: 0, kind: input, shape index: {}]
  %s1 = inlined_call_operand.vmem [shape: f32[128,128], index: 1, kind: input, shape index: {}]
  %s2 = inlined_call_operand.vmem [shape: f32[128,128], index: 2, kind: input, shape index: {}]
  %s3 = inlined_call_operand.vmem [shape: f32[128,1], index: 3, kind: input, shape index: {}]
  %s4 = inlined_call_operand.vmem [shape: f32[1,128], index: 4, kind: input, shape index: {}]
  %s5 = inlined_call_operand.vmem [shape: f32[1,128], index: 5, kind: input, shape index: {}]
  %s6 = inlined_call_operand.hbm [shape: f32[8,128], index: 6, kind: output, shape index: {}]
  %s7 = sld [smem:[#allocation0]]
  $region42: #{noisy_linear.1} parent=0
    _
  %s9 = ssub.s32 1, %s7
  %s10 = scalar_select 0, %s9, %s7
  $region1: #{noisy_linear.1} parent=0
    #allocation3 [shape = 'u8[4096]{0}', space=vmem, size = 0x1000, scoped, tag = 'output window, operand 0, single buffered']
    #allocation4 [shape = 's32[1]{0}', space=sflag, size = 0x4, scoped, tag = 'scoped memory for noisy_linear.1']
    %11 = vsyncpa [#allocation4], 0
    // Predicated region
    $region2: #{noisy_linear.1} parent=1 // pred_check
      _
    $region3: #{noisy_linear.1} parent=1 // pred_check_branch
      %13 = sbr.rel (0) target = $region5
    $region4: #{noisy_linear.1} parent=1 // pred_region
      _
    $region5: #{noisy_linear.1} parent=1 // pred_fallthru
      _
    // Predicated region
    $region6: #{noisy_linear.1} parent=1 // pred_check
      _
    $region7: #{noisy_linear.1} parent=1 // pred_check_branch
      %15 = sbr.rel (0) target = $region9
    $region8: #{noisy_linear.1} parent=1 // pred_region
      _
    $region9: #{noisy_linear.1} parent=1 // pred_fallthru
      _
    // Predicated region
    $region10: #{noisy_linear.1} parent=1 // pred_check
      _
    $region11: #{noisy_linear.1} parent=1 // pred_check_branch
      %17 = sbr.rel (0) target = $region13
    $region12: #{noisy_linear.1} parent=1 // pred_region
      _
    $region13: #{noisy_linear.1} parent=1 // pred_fallthru
      _
    // Predicated region
    $region14: #{noisy_linear.1} parent=1 // pred_check
      _
    $region15: #{noisy_linear.1} parent=1 // pred_check_branch
      %19 = sbr.rel (0) target = $region17
    $region16: #{noisy_linear.1} parent=1 // pred_region
      _
    $region17: #{noisy_linear.1} parent=1 // pred_fallthru
      _
    // Predicated region
    $region18: #{noisy_linear.1} parent=1 // pred_check
      _
    $region19: #{noisy_linear.1} parent=1 // pred_check_branch
      %21 = sbr.rel (0) target = $region21
    $region20: #{noisy_linear.1} parent=1 // pred_region
      _
    $region21: #{noisy_linear.1} parent=1 // pred_fallthru
      _
    // Predicated region
    $region22: #{noisy_linear.1} parent=1 // pred_check
      _
    $region23: #{noisy_linear.1} parent=1 // pred_check_branch
      %23 = sbr.rel (0) target = $region25
    $region24: #{noisy_linear.1} parent=1 // pred_region
      _
    $region25: #{noisy_linear.1} parent=1 // pred_fallthru
      _
    %p24 = scmp.eq.s32.totalorder 0, 0
    // Predicated region
    $region26: #{noisy_linear.1} parent=1 // pred_check
      %p25 = pneg %p24
    $region27: #{noisy_linear.1} parent=1 // pred_check_branch
      %27 = sbr.rel (%p25) target = $region29
    $region28: #{noisy_linear.1} parent=1 // pred_region
      %28 = vst [vmem:[#allocation2] sm:$0xff] 0.0
    $region29: #{noisy_linear.1} parent=1 // pred_fallthru
      _
    %s29 = smul.u32 0, 128
    %s30 = smul.u32 0, 128
    %s31 = sshra.s32 %s30, 7
    %s32 = sand.u32 %s30, 127
    %s33 = sadd.s32 %s31, %s29
    %s34 = scalar_lea.vmem %s1, %s33
    %v35 = vld [vmem:[%s34] sm:$0xff]
    %v36 = vld [vmem:[%s34 + $0x8] sm:$0xff]
    %v37 = vld [vmem:[%s34 + $0x10] sm:$0xff]
    %v38 = vld [vmem:[%s34 + $0x18] sm:$0xff]
    %v39 = vld [vmem:[%s34 + $0x20] sm:$0xff]
    %v40 = vld [vmem:[%s34 + $0x28] sm:$0xff]
    %v41 = vld [vmem:[%s34 + $0x30] sm:$0xff]
    %v42 = vld [vmem:[%s34 + $0x38] sm:$0xff]
    %v43 = vld [vmem:[%s34 + $0x40] sm:$0xff]
    %v44 = vld [vmem:[%s34 + $0x48] sm:$0xff]
    %v45 = vld [vmem:[%s34 + $0x50] sm:$0xff]
    %v46 = vld [vmem:[%s34 + $0x58] sm:$0xff]
    %v47 = vld [vmem:[%s34 + $0x60] sm:$0xff]
    %v48 = vld [vmem:[%s34 + $0x68] sm:$0xff]
    %v49 = vld [vmem:[%s34 + $0x70] sm:$0xff]
    %v50 = vld [vmem:[%s34 + $0x78] sm:$0xff]
    %s51 = scalar_lea.vmem %s2, %s33
    %v52 = vld [vmem:[%s51] sm:$0xff]
    %v53 = vld [vmem:[%s51 + $0x8] sm:$0xff]
    %v54 = vld [vmem:[%s51 + $0x10] sm:$0xff]
    %v55 = vld [vmem:[%s51 + $0x18] sm:$0xff]
    %v56 = vld [vmem:[%s51 + $0x20] sm:$0xff]
    %v57 = vld [vmem:[%s51 + $0x28] sm:$0xff]
    %v58 = vld [vmem:[%s51 + $0x30] sm:$0xff]
    %v59 = vld [vmem:[%s51 + $0x38] sm:$0xff]
    %v60 = vld [vmem:[%s51 + $0x40] sm:$0xff]
    %v61 = vld [vmem:[%s51 + $0x48] sm:$0xff]
    %v62 = vld [vmem:[%s51 + $0x50] sm:$0xff]
    %v63 = vld [vmem:[%s51 + $0x58] sm:$0xff]
    %v64 = vld [vmem:[%s51 + $0x60] sm:$0xff]
    %v65 = vld [vmem:[%s51 + $0x68] sm:$0xff]
    %v66 = vld [vmem:[%s51 + $0x70] sm:$0xff]
    %v67 = vld [vmem:[%s51 + $0x78] sm:$0xff]
    %v68 = vld [vmem:[%s3] sm:$0xff]
    %v69 = vld [vmem:[%s3 + $0x8] sm:$0xff]
    %v70 = vld [vmem:[%s3 + $0x10] sm:$0xff]
    %v71 = vld [vmem:[%s3 + $0x18] sm:$0xff]
    %v72 = vld [vmem:[%s3 + $0x20] sm:$0xff]
    %v73 = vld [vmem:[%s3 + $0x28] sm:$0xff]
    %v74 = vld [vmem:[%s3 + $0x30] sm:$0xff]
    %v75 = vld [vmem:[%s3 + $0x38] sm:$0xff]
    %v76 = vld [vmem:[%s3 + $0x40] sm:$0xff]
    %v77 = vld [vmem:[%s3 + $0x48] sm:$0xff]
    %v78 = vld [vmem:[%s3 + $0x50] sm:$0xff]
    %v79 = vld [vmem:[%s3 + $0x58] sm:$0xff]
    %v80 = vld [vmem:[%s3 + $0x60] sm:$0xff]
    %v81 = vld [vmem:[%s3 + $0x68] sm:$0xff]
    %v82 = vld [vmem:[%s3 + $0x70] sm:$0xff]
    %v83 = vld [vmem:[%s3 + $0x78] sm:$0xff]
    %v84 = vld [vmem:[%s4] sm:$0x1]
    %86 = vset.pattern.permute.xlu0 0
    %87 = vperm.xlu0 %86, %v68
    %v88 = vpop.permute.xlu0 %87
    %91 = vset.pattern.permute.xlu0 0
    %92 = vperm.xlu0 %91, %v69
    %v93 = vpop.permute.xlu0 %92
    %96 = vset.pattern.permute.xlu0 0
    %97 = vperm.xlu0 %96, %v70
    %v98 = vpop.permute.xlu0 %97
    %101 = vset.pattern.permute.xlu0 0
    %102 = vperm.xlu0 %101, %v71
    %v103 = vpop.permute.xlu0 %102
    %106 = vset.pattern.permute.xlu0 0
    %107 = vperm.xlu0 %106, %v72
    %v108 = vpop.permute.xlu0 %107
    %111 = vset.pattern.permute.xlu0 0
    %112 = vperm.xlu0 %111, %v73
    %v113 = vpop.permute.xlu0 %112
    %116 = vset.pattern.permute.xlu0 0
    %117 = vperm.xlu0 %116, %v74
    %v118 = vpop.permute.xlu0 %117
    %121 = vset.pattern.permute.xlu0 0
    %122 = vperm.xlu0 %121, %v75
    %v123 = vpop.permute.xlu0 %122
    %126 = vset.pattern.permute.xlu0 0
    %127 = vperm.xlu0 %126, %v76
    %v128 = vpop.permute.xlu0 %127
    %131 = vset.pattern.permute.xlu0 0
    %132 = vperm.xlu0 %131, %v77
    %v133 = vpop.permute.xlu0 %132
    %136 = vset.pattern.permute.xlu0 0
    %137 = vperm.xlu0 %136, %v78
    %v138 = vpop.permute.xlu0 %137
    %141 = vset.pattern.permute.xlu0 0
    %142 = vperm.xlu0 %141, %v79
    %v143 = vpop.permute.xlu0 %142
    %146 = vset.pattern.permute.xlu0 0
    %147 = vperm.xlu0 %146, %v80
    %v148 = vpop.permute.xlu0 %147
    %151 = vset.pattern.permute.xlu0 0
    %152 = vperm.xlu0 %151, %v81
    %v153 = vpop.permute.xlu0 %152
    %156 = vset.pattern.permute.xlu0 0
    %157 = vperm.xlu0 %156, %v82
    %v158 = vpop.permute.xlu0 %157
    %161 = vset.pattern.permute.xlu0 0
    %162 = vperm.xlu0 %161, %v83
    %v163 = vpop.permute.xlu0 %162
    %v166 = vperm.slane %v84, 0
    %v168 = vmul.f32 %v88, %v166
    %v169 = vmul.f32 %v93, %v166
    %v170 = vmul.f32 %v98, %v166
    %v171 = vmul.f32 %v103, %v166
    %v172 = vmul.f32 %v108, %v166
    %v173 = vmul.f32 %v113, %v166
    %v174 = vmul.f32 %v118, %v166
    %v175 = vmul.f32 %v123, %v166
    %v176 = vmul.f32 %v128, %v166
    %v177 = vmul.f32 %v133, %v166
    %v178 = vmul.f32 %v138, %v166
    %v179 = vmul.f32 %v143, %v166
    %v180 = vmul.f32 %v148, %v166
    %v181 = vmul.f32 %v153, %v166
    %v182 = vmul.f32 %v158, %v166
    %v183 = vmul.f32 %v163, %v166
    %v184 = vmul.f32 %v168, %v52
    %v185 = vmul.f32 %v169, %v53
    %v186 = vmul.f32 %v170, %v54
    %v187 = vmul.f32 %v171, %v55
    %v188 = vmul.f32 %v172, %v56
    %v189 = vmul.f32 %v173, %v57
    %v190 = vmul.f32 %v174, %v58
    %v191 = vmul.f32 %v175, %v59
    %v192 = vmul.f32 %v176, %v60
    %v193 = vmul.f32 %v177, %v61
    %v194 = vmul.f32 %v178, %v62
    %v195 = vmul.f32 %v179, %v63
    %v196 = vmul.f32 %v180, %v64
    %v197 = vmul.f32 %v181, %v65
    %v198 = vmul.f32 %v182, %v66
    %v199 = vmul.f32 %v183, %v67
    %v200 = vadd.f32 %v35, %v184
    %v201 = vadd.f32 %v36, %v185
    %v202 = vadd.f32 %v37, %v186
    %v203 = vadd.f32 %v38, %v187
    %v204 = vadd.f32 %v39, %v188
    %v205 = vadd.f32 %v40, %v189
    %v206 = vadd.f32 %v41, %v190
    %v207 = vadd.f32 %v42, %v191
    %v208 = vadd.f32 %v43, %v192
    %v209 = vadd.f32 %v44, %v193
    %v210 = vadd.f32 %v45, %v194
    %v211 = vadd.f32 %v46, %v195
    %v212 = vadd.f32 %v47, %v196
    %v213 = vadd.f32 %v48, %v197
    %v214 = vadd.f32 %v49, %v198
    %v215 = vadd.f32 %v50, %v199
    %v216 = vld [vmem:[#allocation2] sm:$0xff]
    %v217 = vld [vmem:[%s0] sm:$0xff]
    %218 = vmatpush.msra.mxu0 %v215
    %219 = vmatpush.msra.mxu0 %v214
    %220 = vmatpush.msra.mxu0 %v213
    %221 = vmatpush.msra.mxu0 %v212
    %222 = vmatpush.msra.mxu0 %v211
    %223 = vmatpush.msra.mxu0 %v210
    %224 = vmatpush.msra.mxu0 %v209
    %225 = vmatpush.msra.mxu0 %v208
    %226 = vmatpush.msra.mxu0 %v207
    %227 = vmatpush.msra.mxu0 %v206
    %228 = vmatpush.msra.mxu0 %v205
    %229 = vmatpush.msra.mxu0 %v204
    %230 = vmatpush.msra.mxu0 %v203
    %231 = vmatpush.msra.mxu0 %v202
    %232 = vmatpush.msra.mxu0 %v201
    %233 = vmatpush.msra.mxu0 %v200
    %234 = vmatmul.f32.gmra.mxu0 %v217
    %v235 = vpop.f32.mrf.mxu0
    %v236 = vadd.f32 0.0, %v235
    %237 = vdwg.mxu0
    %v238 = vadd.f32 %v216, %v236
    %239 = vst [vmem:[#allocation2] sm:$0xff] %v238
    // Predicated region
    $region30: #{noisy_linear.1} parent=1 // pred_check
      %p240 = pneg %p24
    $region31: #{noisy_linear.1} parent=1 // pred_check_branch
      %242 = sbr.rel (%p240) target = $region33
    $region32: #{noisy_linear.1} parent=1 // pred_region
      %v243 = vld [vmem:[#allocation2] sm:$0xff]
      %v244 = vld [vmem:[%s5] sm:$0x1]
      %v246 = vperm.slane %v244, 0
      %v248 = vadd.f32 %v243, %v246
      %249 = vst [vmem:[#allocation3] sm:$0xff] %v248
    $region33: #{noisy_linear.1} parent=1 // pred_fallthru
      _
    // Predicated region
    $region34: #{noisy_linear.1} parent=1 // pred_check
      _
    $region35: #{noisy_linear.1} parent=1 // pred_check_branch
      %251 = sbr.rel (0) target = $region37
    $region36: #{noisy_linear.1} parent=1 // pred_region
      %253 = vsyncadd [#allocation4], 0
      %s255 = sshll.u32 [#allocation3], 4
      %s256 = int_to_ptr.vmem [resolvable:$true] %s255
      %s257 = sshll.u32 %s6, 4
      %s258 = int_to_ptr.hbm [resolvable:$true] %s257
      %260 = dma.vmem_to_hbm [thread:$0]  %s256, 128, %s258, [#allocation4]
    $region37: #{noisy_linear.1} parent=1 // pred_fallthru
      _
    // Predicated region
    $region38: #{noisy_linear.1} parent=1 // pred_check
      _
    $region39: #{noisy_linear.1} parent=1 // pred_check_branch
      %262 = sbr.rel (0) target = $region41
    $region40: #{noisy_linear.1} parent=1 // pred_region
      %264 = dma.done [#allocation4], 128
    $region41: #{noisy_linear.1} parent=1 // pred_fallthru
      _
    %265 = vsyncpa [#allocation4], 1

</llo_original>
